<compile_context>
chip_gen: v5e
topology: v5e:2x2
jax: 0.10.0
libtpu: 0.0.40
codegen_flags: <defaults>
</compile_context>

<pallas_src>
import jax
import jax.numpy as jnp
from jax.experimental import pallas as pl
from jax.experimental.pallas import tpu as pltpu

BN_EPS = 1e-5  # PyTorch BatchNorm1d default


def _fill_padded(xpad_ref, x_ref, padding, l):
    """Copy the unpadded x tile into a zero-padded VMEM scratch.

    Pads are re-zeroed every step so correctness never depends on which grid
    steps a given core executes (megacore / parallel-axis safe)."""
    nb, cin, lp = xpad_ref.shape
    if padding > 0:
        zpad = jnp.zeros((nb, cin, padding), xpad_ref.dtype)
        xpad_ref[:, :, :padding] = zpad
        xpad_ref[:, :, lp - padding:] = zpad
    xpad_ref[:, :, padding:padding + l] = x_ref[...]


def _conv_tile(xpad, w, dilation, l_out):
    """xpad: (NB, Cin, Lp) padded tile; w: (3, Cout, Cin) tap matrices.

    Returns f32 (NB, Cout, L_out) via three accumulated batched MXU dots
    (no tap-concat copy)."""
    nb, cin, _ = xpad.shape
    cout = w.shape[1]
    y = jnp.zeros((nb, cout, l_out), jnp.float32)
    for t in range(3):
        tap = xpad[:, :, t * dilation: t * dilation + l_out]        # (NB, Cin, L_out)
        w_t = jnp.broadcast_to(w[t], (nb, cout, cin))                # (NB, Cout, Cin)
        y = y + jnp.einsum('noc,ncl->nol', w_t, tap,
                           preferred_element_type=jnp.float32)
    return y


def _make_stats_kernel(dilation, padding, l, l_out):
    def stats_kernel(x_ref, w_ref, sum_ref, sumsq_ref, xpad_ref):
        # sum_ref / sumsq_ref: resident (Cout, L_out) lane-wide accumulators
        # across the N grid ("arbitrary" reduction axis).
        @pl.when(pl.program_id(0) == 0)
        def _init():
            sum_ref[...] = jnp.zeros_like(sum_ref)
            sumsq_ref[...] = jnp.zeros_like(sumsq_ref)

        _fill_padded(xpad_ref, x_ref, padding, l)
        w = w_ref[...]
        y = _conv_tile(xpad_ref[...], w, dilation, l_out)            # (NB, Cout, L_out)
        # Pure VPU adds per step; cross-lane reduce deferred to the glue.
        # NOTE: E[y^2]-E[y]^2 in f32 can cancel for very large N*L_out with a
        # strong per-channel DC component; acceptable at these scales.
        sum_ref[...] += jnp.sum(y, axis=0)
        sumsq_ref[...] += jnp.sum(y * y, axis=0)

    return stats_kernel


def _make_apply_kernel(dilation, padding, l, l_out):
    def apply_kernel(x_ref, w_ref, scale_ref, shift_ref, o_ref, xpad_ref):
        _fill_padded(xpad_ref, x_ref, padding, l)
        w = w_ref[...]
        y = _conv_tile(xpad_ref[...], w, dilation, l_out)            # (NB, Cout, L_out)
        scale = scale_ref[...][None, :, :]                           # (1, Cout, 1)
        shift = shift_ref[...][None, :, :]
        # Single FMA + max per element, stored straight to the output block.
        o_ref[...] = jnp.maximum(y * scale + shift, 0.0).astype(o_ref.dtype)

    return apply_kernel


def _pick_batch_block(n, cin, cout, l, lp, l_out):
    """Largest divisor of N whose per-step VMEM footprint stays a few MiB."""
    per_row = 4 * (2 * cin * l            # x tile, double-buffered
                   + cin * lp             # padded scratch
                   + 3 * cin * l_out      # tap slices (may materialize)
                   + 4 * cout * l_out     # y tile + output double-buffer
                   + 3 * cout * cin)      # broadcast weights
    budget = 8 << 20
    best = 1
    for nb in range(1, n + 1):
        if n % nb == 0 and nb * per_row <= budget:
            best = nb
    return best


def conv3_forward(x, conv_w, conv_b, bn_gamma, bn_beta, *, dilation, padding):
    """x: (N, Cin, L) f32 -> (N, Cout, L_out) f32, matching Conv_3.forward (train mode)."""
    # Train-mode BN subtracts the batch mean of conv(x)+b per channel, so the
    # per-channel constant bias cancels exactly; intentionally dropped.
    del conv_b
    N, Cin, L = x.shape
    Cout = conv_w.shape[0]
    assert conv_w.shape == (Cout, Cin, 3)
    L_out = L + 2 * padding - 2 * dilation
    assert L_out >= 1, "invalid dilation/padding for this length"
    Lp = L + 2 * padding

    # Weight taps as (3, Cout, Cin): w_taps[t] is the (Cout, Cin) matrix of tap t.
    w_taps = jnp.transpose(conv_w, (2, 0, 1)).astype(jnp.float32)

    NB = _pick_batch_block(N, Cin, Cout, L, Lp, L_out)
    grid = (N // NB,)

    x_spec = pl.BlockSpec((NB, Cin, L), lambda n: (n, 0, 0))
    w_spec = pl.BlockSpec((3, Cout, Cin), lambda n: (0, 0, 0))
    vec_spec = pl.BlockSpec((Cout, 1), lambda n: (0, 0))
    part_spec = pl.BlockSpec((Cout, L_out), lambda n: (0, 0))
    out_spec = pl.BlockSpec((NB, Cout, L_out), lambda n: (n, 0, 0))
    scratch = [pltpu.VMEM((NB, Cin, Lp), jnp.float32)]

    per_step_bytes = 4 * (2 * NB * Cin * L + 2 * 3 * Cout * Cin + NB * Cin * Lp
                          + 3 * NB * Cin * L_out + 3 * NB * Cout * Cin
                          + 3 * NB * Cout * L_out + 2 * Cout * L_out)
    # Cap at 40 MiB so the budget is also safe on v7x (64 MiB physical VMEM).
    vmem_limit = int(min(max(per_step_bytes + (4 << 20), 16 << 20), 40 << 20))

    # ---- Pass 1: lane-wide per-channel partial sum / sum-of-squares of conv(x) ----
    sum_part, sumsq_part = pl.pallas_call(
        _make_stats_kernel(dilation, padding, L, L_out),
        out_shape=(jax.ShapeDtypeStruct((Cout, L_out), jnp.float32),
                   jax.ShapeDtypeStruct((Cout, L_out), jnp.float32)),
        grid_spec=pltpu.PrefetchScalarGridSpec(
            num_scalar_prefetch=0,
            grid=grid,
            in_specs=[x_spec, w_spec],
            out_specs=(part_spec, part_spec),
            scratch_shapes=scratch),
        compiler_params=pltpu.CompilerParams(
            dimension_semantics=("arbitrary",),          # reduction over N
            vmem_limit_bytes=vmem_limit),
    )(x, w_taps)

    # ---- Tiny glue: one cross-lane reduce + fold BN into per-channel scale/shift ----
    inv_count = 1.0 / (float(N) * float(L_out))
    ch_sum = jnp.sum(sum_part, axis=1, keepdims=True)                 # (Cout, 1)
    ch_sumsq = jnp.sum(sumsq_part, axis=1, keepdims=True)             # (Cout, 1)
    mean = ch_sum * inv_count
    var = jnp.maximum(ch_sumsq * inv_count - mean * mean, 0.0)        # biased var
    scale = bn_gamma.reshape(Cout, 1).astype(jnp.float32) * jax.lax.rsqrt(var + BN_EPS)
    shift = bn_beta.reshape(Cout, 1).astype(jnp.float32) - mean * scale

    # ---- Pass 2: recompute conv, normalize + ReLU (parallel over N) ----
    out = pl.pallas_call(
        _make_apply_kernel(dilation, padding, L, L_out),
        out_shape=jax.ShapeDtypeStruct((N, Cout, L_out), jnp.float32),
        grid_spec=pltpu.PrefetchScalarGridSpec(
            num_scalar_prefetch=0,
            grid=grid,
            in_specs=[x_spec, w_spec, vec_spec, vec_spec],
            out_specs=out_spec,
            scratch_shapes=scratch),
        compiler_params=pltpu.CompilerParams(
            dimension_semantics=("parallel",),            # megacore-shardable
            vmem_limit_bytes=vmem_limit),
    )(x, w_taps, scale, shift)

    return out


def _reference(x, conv_w, conv_b, bn_gamma, bn_beta, dilation, padding):
    """Pure-JAX reference (keeps the conv bias; train-mode BN; ReLU)."""
    y = jax.lax.conv_general_dilated(
        x, conv_w,
        window_strides=(1,),
        padding=[(padding, padding)],
        rhs_dilation=(dilation,),
        dimension_numbers=("NCH", "OIH", "NCH"))
    y = y + conv_b[None, :, None]
    mean = jnp.mean(y, axis=(0, 2), keepdims=True)
    var = jnp.mean((y - mean) ** 2, axis=(0, 2), keepdims=True)
    y = (y - mean) * jax.lax.rsqrt(var + BN_EPS)
    y = y * bn_gamma[None, :, None] + bn_beta[None, :, None]
    return jnp.maximum(y, 0.0)


if __name__ == "__main__":
    key = jax.random.PRNGKey(0)
    k_x, k_w, k_b, k_g, k_be = jax.random.split(key, 5)

    # Small shapes consistent with Conv_3 (batch=2, chs_in=4, chs_out=8, length=16).
    N, Cin, Cout, L = 2, 4, 8, 16
    dilation, padding = 2, 2            # "same" output length for k=3

    x = jax.random.normal(k_x, (N, Cin, L), dtype=jnp.float32)
    conv_w = jax.random.normal(k_w, (Cout, Cin, 3), dtype=jnp.float32) * 0.1
    conv_b = jax.random.normal(k_b, (Cout,), dtype=jnp.float32) * 0.1
    bn_gamma = 1.0 + 0.1 * jax.random.normal(k_g, (Cout,), dtype=jnp.float32)
    bn_beta = 0.1 * jax.random.normal(k_be, (Cout,), dtype=jnp.float32)

    out = conv3_forward(x, conv_w, conv_b, bn_gamma, bn_beta,
                        dilation=dilation, padding=padding)
    out = jax.block_until_ready(out)

    ref = _reference(x, conv_w, conv_b, bn_gamma, bn_beta, dilation, padding)
    assert out.shape == ref.shape == (N, Cout, L)
    assert jnp.allclose(out, ref, atol=1e-4, rtol=1e-4), "mismatch vs reference"

    print("KERNEL_OK")
</pallas_src>

<mosaic_0001>
module attributes {stable_mosaic.version = 11 : i64} {
  func.func @stats_kernel(%arg0: i32, %arg1: memref<2x4x16xf32, #tpu.memory_space<vmem>>, %arg2: memref<3x8x4xf32, #tpu.memory_space<vmem>>, %arg3: memref<8x16xf32, #tpu.memory_space<vmem>>, %arg4: memref<8x16xf32, #tpu.memory_space<vmem>>, %arg5: memref<2x4x20xf32, #tpu.memory_space<vmem>>) attributes {dimension_semantics = [#tpu.dimension_semantics<arbitrary>], iteration_bounds = array<i64: 1>, scalar_prefetch = 0 : i64, scratch_operands = 1 : i64, tpu.core_type = #tpu.core_type<tc>, window_params = [{transform_indices = @transform_0, window_bounds = array<i64: 2, 4, 16>}, {pipeline_mode = #tpu.pipeline_mode<synchronous>, transform_indices = @transform_1, window_bounds = array<i64: 3, 8, 4>}, {pipeline_mode = #tpu.pipeline_mode<synchronous>, transform_indices = @transform_2, window_bounds = array<i64: 8, 16>}, {pipeline_mode = #tpu.pipeline_mode<synchronous>, transform_indices = @transform_3, window_bounds = array<i64: 8, 16>}]} {
    %c0_i32 = arith.constant 0 : i32
    %0 = arith.cmpi eq, %arg0, %c0_i32 : i32
    %1 = arith.extui %0 : i1 to i32
    %c0_i32_0 = arith.constant 0 : i32
    %2 = arith.cmpi ne, %1, %c0_i32_0 : i32
    scf.if %2 {
      %cst_30 = arith.constant 0.000000e+00 : f32
      %41 = vector.broadcast %cst_30 : f32 to vector<8x16xf32>
      %c0_31 = arith.constant 0 : index
      %c0_32 = arith.constant 0 : index
      %42 = vector.load %arg3[%c0_31, %c0_32] : memref<8x16xf32, #tpu.memory_space<vmem>>, vector<8x16xf32>
      tpu.vector_store %arg3[%c0_31, %c0_32], %41 {strides = array<i32>} : memref<8x16xf32, #tpu.memory_space<vmem>>, vector<8x16xf32>,
      %cst_33 = arith.constant 0.000000e+00 : f32
      %43 = vector.broadcast %cst_33 : f32 to vector<8x16xf32>
      %c0_34 = arith.constant 0 : index
      %c0_35 = arith.constant 0 : index
      %44 = vector.load %arg4[%c0_34, %c0_35] : memref<8x16xf32, #tpu.memory_space<vmem>>, vector<8x16xf32>
      tpu.vector_store %arg4[%c0_34, %c0_35], %43 {strides = array<i32>} : memref<8x16xf32, #tpu.memory_space<vmem>>, vector<8x16xf32>,
    } else {
    }
    %cst = arith.constant 0.000000e+00 : f32
    %3 = vector.broadcast %cst : f32 to vector<2x4x2xf32>
    %c0 = arith.constant 0 : index
    %c0_1 = arith.constant 0 : index
    %c0_2 = arith.constant 0 : index
    %4 = vector.load %arg5[%c0, %c0_1, %c0_2] : memref<2x4x20xf32, #tpu.memory_space<vmem>>, vector<2x4x2xf32>
    tpu.vector_store %arg5[%c0, %c0_1, %c0_2], %3 {strides = array<i32>} : memref<2x4x20xf32, #tpu.memory_space<vmem>>, vector<2x4x2xf32>,
    %c0_3 = arith.constant 0 : index
    %c0_4 = arith.constant 0 : index
    %c18 = arith.constant 18 : index
    %5 = vector.load %arg5[%c0_3, %c0_4, %c18] : memref<2x4x20xf32, #tpu.memory_space<vmem>>, vector<2x4x2xf32>
    tpu.vector_store %arg5[%c0_3, %c0_4, %c18], %3 {strides = array<i32>} : memref<2x4x20xf32, #tpu.memory_space<vmem>>, vector<2x4x2xf32>,
    %c0_5 = arith.constant 0 : index
    %c0_6 = arith.constant 0 : index
    %c0_7 = arith.constant 0 : index
    %6 = vector.load %arg1[%c0_5, %c0_6, %c0_7] : memref<2x4x16xf32, #tpu.memory_space<vmem>>, vector<2x4x16xf32>
    %c0_8 = arith.constant 0 : index
    %c0_9 = arith.constant 0 : index
    %c2 = arith.constant 2 : index
    %7 = vector.load %arg5[%c0_8, %c0_9, %c2] : memref<2x4x20xf32, #tpu.memory_space<vmem>>, vector<2x4x16xf32>
    tpu.vector_store %arg5[%c0_8, %c0_9, %c2], %6 {strides = array<i32>} : memref<2x4x20xf32, #tpu.memory_space<vmem>>, vector<2x4x16xf32>,
    %c0_10 = arith.constant 0 : index
    %c0_11 = arith.constant 0 : index
    %c0_12 = arith.constant 0 : index
    %8 = vector.load %arg2[%c0_10, %c0_11, %c0_12] : memref<3x8x4xf32, #tpu.memory_space<vmem>>, vector<3x8x4xf32>
    %c0_13 = arith.constant 0 : index
    %c0_14 = arith.constant 0 : index
    %c0_15 = arith.constant 0 : index
    %9 = vector.load %arg5[%c0_13, %c0_14, %c0_15] : memref<2x4x20xf32, #tpu.memory_space<vmem>>, vector<2x4x20xf32>
    %cst_16 = arith.constant 0.000000e+00 : f32
    %10 = vector.broadcast %cst_16 : f32 to vector<2x8x16xf32>
    %11 = vector.extract_strided_slice %9 {offsets = [0, 0, 0], sizes = [2, 4, 16], strides = [1, 1, 1]} : vector<2x4x20xf32> to vector<2x4x16xf32>
    %12 = vector.extract_strided_slice %8 {offsets = [0, 0, 0], sizes = [1, 8, 4], strides = [1, 1, 1]} : vector<3x8x4xf32> to vector<1x8x4xf32>
    %13 = vector.shape_cast %12 : vector<1x8x4xf32> to vector<8x4xf32>
    %14 = vector.shape_cast %13 : vector<8x4xf32> to vector<1x8x4xf32>
    %15 = vector.broadcast %14 : vector<1x8x4xf32> to vector<2x8x4xf32>
    "tpu.trace_start"() <{level = 10 : i32, message = "noc,ncl->nol"}> : () -> ()
    %cst_17 = arith.constant dense<0.000000e+00> : vector<2x8x16xf32>
    %16 = tpu.matmul %15, %11, %cst_17 {dimension_numbers = #tpu.dot_dimension_numbers<[2], [1], [1], [2], [0, 0, 0, 1, 1, 2], [0], [0]>} : vector<2x8x4xf32>, vector<2x4x16xf32>, vector<2x8x16xf32> -> vector<2x8x16xf32>
    "tpu.trace_stop"() : () -> ()
    %17 = arith.addf %10, %16 : vector<2x8x16xf32>
    %18 = vector.extract_strided_slice %9 {offsets = [0, 0, 2], sizes = [2, 4, 16], strides = [1, 1, 1]} : vector<2x4x20xf32> to vector<2x4x16xf32>
    %19 = vector.extract_strided_slice %8 {offsets = [1, 0, 0], sizes = [1, 8, 4], strides = [1, 1, 1]} : vector<3x8x4xf32> to vector<1x8x4xf32>
    %20 = vector.shape_cast %19 : vector<1x8x4xf32> to vector<8x4xf32>
    %21 = vector.shape_cast %20 : vector<8x4xf32> to vector<1x8x4xf32>
    %22 = vector.broadcast %21 : vector<1x8x4xf32> to vector<2x8x4xf32>
    "tpu.trace_start"() <{level = 10 : i32, message = "noc,ncl->nol"}> : () -> ()
    %cst_18 = arith.constant dense<0.000000e+00> : vector<2x8x16xf32>
    %23 = tpu.matmul %22, %18, %cst_18 {dimension_numbers = #tpu.dot_dimension_numbers<[2], [1], [1], [2], [0, 0, 0, 1, 1, 2], [0], [0]>} : vector<2x8x4xf32>, vector<2x4x16xf32>, vector<2x8x16xf32> -> vector<2x8x16xf32>
    "tpu.trace_stop"() : () -> ()
    %24 = arith.addf %17, %23 : vector<2x8x16xf32>
    %25 = vector.extract_strided_slice %9 {offsets = [0, 0, 4], sizes = [2, 4, 16], strides = [1, 1, 1]} : vector<2x4x20xf32> to vector<2x4x16xf32>
    %26 = vector.extract_strided_slice %8 {offsets = [2, 0, 0], sizes = [1, 8, 4], strides = [1, 1, 1]} : vector<3x8x4xf32> to vector<1x8x4xf32>
    %27 = vector.shape_cast %26 : vector<1x8x4xf32> to vector<8x4xf32>
    %28 = vector.shape_cast %27 : vector<8x4xf32> to vector<1x8x4xf32>
    %29 = vector.broadcast %28 : vector<1x8x4xf32> to vector<2x8x4xf32>
    "tpu.trace_start"() <{level = 10 : i32, message = "noc,ncl->nol"}> : () -> ()
    %cst_19 = arith.constant dense<0.000000e+00> : vector<2x8x16xf32>
    %30 = tpu.matmul %29, %25, %cst_19 {dimension_numbers = #tpu.dot_dimension_numbers<[2], [1], [1], [2], [0, 0, 0, 1, 1, 2], [0], [0]>} : vector<2x8x4xf32>, vector<2x4x16xf32>, vector<2x8x16xf32> -> vector<2x8x16xf32>
    "tpu.trace_stop"() : () -> ()
    %31 = arith.addf %24, %30 : vector<2x8x16xf32>
    %c0_20 = arith.constant 0 : index
    %c0_21 = arith.constant 0 : index
    %32 = vector.load %arg3[%c0_20, %c0_21] : memref<8x16xf32, #tpu.memory_space<vmem>>, vector<8x16xf32>
    %cst_22 = arith.constant dense<0.000000e+00> : vector<8x16xf32>
    %33 = vector.multi_reduction <add>, %31, %cst_22 [0] : vector<2x8x16xf32> to vector<8x16xf32>
    %34 = arith.addf %32, %33 : vector<8x16xf32>
    %c0_23 = arith.constant 0 : index
    %c0_24 = arith.constant 0 : index
    %35 = vector.load %arg3[%c0_23, %c0_24] : memref<8x16xf32, #tpu.memory_space<vmem>>, vector<8x16xf32>
    tpu.vector_store %arg3[%c0_23, %c0_24], %34 {strides = array<i32>} : memref<8x16xf32, #tpu.memory_space<vmem>>, vector<8x16xf32>,
    %c0_25 = arith.constant 0 : index
    %c0_26 = arith.constant 0 : index
    %36 = vector.load %arg4[%c0_25, %c0_26] : memref<8x16xf32, #tpu.memory_space<vmem>>, vector<8x16xf32>
    %37 = arith.mulf %31, %31 : vector<2x8x16xf32>
    %cst_27 = arith.constant dense<0.000000e+00> : vector<8x16xf32>
    %38 = vector.multi_reduction <add>, %37, %cst_27 [0] : vector<2x8x16xf32> to vector<8x16xf32>
    %39 = arith.addf %36, %38 : vector<8x16xf32>
    %c0_28 = arith.constant 0 : index
    %c0_29 = arith.constant 0 : index
    %40 = vector.load %arg4[%c0_28, %c0_29] : memref<8x16xf32, #tpu.memory_space<vmem>>, vector<8x16xf32>
    tpu.vector_store %arg4[%c0_28, %c0_29], %39 {strides = array<i32>} : memref<8x16xf32, #tpu.memory_space<vmem>>, vector<8x16xf32>,
    return
  }
  func.func @transform_0(%arg0: i32) -> (i32, i32, i32) {
    %c0_i32 = arith.constant 0 : i32
    %c0_i32_0 = arith.constant 0 : i32
    %c0_i32_1 = arith.constant 0 : i32
    return %arg0, %c0_i32, %c0_i32_0 : i32, i32, i32
  }
  func.func @transform_1(%arg0: i32) -> (i32, i32, i32) {
    %c0_i32 = arith.constant 0 : i32
    %c0_i32_0 = arith.constant 0 : i32
    %c0_i32_1 = arith.constant 0 : i32
    %c0_i32_2 = arith.constant 0 : i32
    return %c0_i32, %c0_i32_0, %c0_i32_1 : i32, i32, i32
  }
  func.func @transform_2(%arg0: i32) -> (i32, i32) {
    %c0_i32 = arith.constant 0 : i32
    %c0_i32_0 = arith.constant 0 : i32
    %c0_i32_1 = arith.constant 0 : i32
    return %c0_i32, %c0_i32_0 : i32, i32
  }
  func.func @transform_3(%arg0: i32) -> (i32, i32) {
    %c0_i32 = arith.constant 0 : i32
    %c0_i32_0 = arith.constant 0 : i32
    %c0_i32_1 = arith.constant 0 : i32
    return %c0_i32, %c0_i32_0 : i32, i32
  }
}

</mosaic_0001>

<llo_original>
// kernel: tpu_custom_call.1
$region0: #{tpu_custom_call.1}
  #allocation0 [shape = 'u32[]', space=smem, size = 0x4, offset = 0x4, fixed_abs, tag = 'smem constant byte address 0x4 - core index']
  #allocation1 [shape = 'u32[72,128]{1,0:T(1,128)}', space=vmem, size = 0x9000, scoped, tag = 'internal scratch']
  #allocation2 [shape = 'f32[2,4,20]{2,1,0:T(4,128)}', space=vmem, size = 0x1000, scoped, tag = 'scratch operand']
  %s0 = inlined_call_operand.vmem [shape: f32[2,4,16], index: 0, kind: input, shape index: {}]
  %s1 = inlined_call_operand.vmem [shape: f32[3,8,4], index: 1, kind: input, shape index: {}]
  %s2 = inlined_call_operand.hbm [shape: f32[8,16], index: 2, kind: output, shape index: {0}]
  %s3 = inlined_call_operand.hbm [shape: f32[8,16], index: 3, kind: output, shape index: {1}]
  %4 = xla_tuple %s2, %s3
  %s5 = sld [smem:[#allocation0]]
  $region30: #{tpu_custom_call.1} parent=0
    _
  %s7 = ssub.s32 1, %s5
  %s8 = scalar_select 0, %s7, %s5
  $region1: #{tpu_custom_call.1} parent=0
    #allocation3 [shape = 'u8[4096]{0}', space=vmem, size = 0x1000, scoped, tag = 'output window, operand 0, single buffered']
    #allocation4 [shape = 's32[1]{0}', space=sflag, size = 0x4, scoped, tag = 'scoped memory for tpu_custom_call.1']
    #allocation5 [shape = 'u8[4096]{0}', space=vmem, size = 0x1000, scoped, tag = 'output window, operand 1, single buffered']
    #allocation6 [shape = 's32[1]{0}', space=sflag, size = 0x4, scoped, tag = 'scoped memory for tpu_custom_call.1']
    %9 = vsyncpa [#allocation4], 0
    %10 = vsyncpa [#allocation6], 0
    // Predicated region
    $region2: #{tpu_custom_call.1} parent=1 // pred_check
      _
    $region3: #{tpu_custom_call.1} parent=1 // pred_check_branch
      %12 = sbr.rel (0) target = $region5
    $region4: #{tpu_custom_call.1} parent=1 // pred_region
      _
    $region5: #{tpu_custom_call.1} parent=1 // pred_fallthru
      _
    // Predicated region
    $region6: #{tpu_custom_call.1} parent=1 // pred_check
      _
    $region7: #{tpu_custom_call.1} parent=1 // pred_check_branch
      %14 = sbr.rel (0) target = $region9
    $region8: #{tpu_custom_call.1} parent=1 // pred_region
      _
    $region9: #{tpu_custom_call.1} parent=1 // pred_fallthru
      _
    %p15 = scmp.eq.s32.totalorder 0, 0
    // Predicated region
    $region10: #{tpu_custom_call.1} parent=1 // pred_check
      %p16 = pneg %p15
    $region11: #{tpu_custom_call.1} parent=1 // pred_check_branch
      %18 = sbr.rel (%p16) target = $region13
    $region12: #{tpu_custom_call.1} parent=1 // pred_region
      %vm19 = vcmask 130048
      %20 = vst.msk [vmem:[#allocation3] sm:$0xff] %vm19, 0.0
      %21 = vst.msk [vmem:[#allocation5] sm:$0xff] %vm19, 0.0
    $region13: #{tpu_custom_call.1} parent=1 // pred_fallthru
      _
    %vm22 = vcmask 11264
    %23 = vst.msk [vmem:[#allocation2] sm:$0xf] %vm22, 0.0
    %24 = vst.msk [vmem:[#allocation2 + $0x4] sm:$0xf] %vm22, 0.0
    %vm25 = vcmask 158864
    %26 = vst.msk [vmem:[#allocation2] sm:$0xf] %vm25, 0.0
    %27 = vst.msk [vmem:[#allocation2 + $0x4] sm:$0xf] %vm25, 0.0
    %v28 = vld [vmem:[%s0] sm:$0xf]
    %v29 = vld [vmem:[%s0 + $0x4] sm:$0xf]
    %32 = vrot.lane.b32.xlu0 %v28, 2
    %v33 = vpop.permute.xlu0 %32
    %34 = vrot.lane.b32.xlu0 %v29, 2
    %v35 = vpop.permute.xlu0 %34
    %vm38 = vcmask 142352
    %39 = vst.msk [vmem:[#allocation2] sm:$0xf] %vm38, %v33
    %40 = vst.msk [vmem:[#allocation2 + $0x4] sm:$0xf] %vm38, %v35
    %v41 = vld [vmem:[%s1] sm:$0xff]
    %v42 = vld [vmem:[%s1 + $0x8] sm:$0xff]
    %v43 = vld [vmem:[%s1 + $0x10] sm:$0xff]
    %v44 = vld [vmem:[#allocation2] sm:$0xf]
    %v45 = vld [vmem:[#allocation2 + $0x4] sm:$0xf]
    %47 = vrot.lane.b32.xlu0 %v44, 126
    %v48 = vpop.permute.xlu0 %47
    %vm49 = vcmask 31744
    %v51 = vsel %vm49, %v42, 0
    %vm53 = vcmask 1043456
    %v54 = vsel %vm53, %v48, 0
    %56 = vmatpush.msra.mxu0 0.0
    %57 = vmatpush.msra.mxu0 0.0
    %58 = vmatpush.msra.mxu0 0.0
    %59 = vmatpush.msra.mxu0 0.0
    %60 = vmatpush.msra.mxu0 0.0
    %61 = vmatpush.msra.mxu0 0.0
    %62 = vmatpush.msra.mxu0 0.0
    %63 = vmatpush.msra.mxu0 0.0
    %64 = vmatpush.msra.mxu0 0.0
    %65 = vmatpush.msra.mxu0 0.0
    %66 = vmatpush.msra.mxu0 0.0
    %67 = vmatpush.msra.mxu0 0.0
    %68 = vmatpush.msra.mxu0 0.0
    %69 = vmatpush.msra.mxu0 0.0
    %70 = vmatpush.msra.mxu0 0.0
    %71 = vmatpush.msra.mxu0 %v54
    %72 = vmatmul.f32.gmra.mxu0 %v51
    %v73 = vpop.f32.mrf.mxu0
    %v74 = vadd.f32 0.0, %v73
    %75 = vdwg.mxu0
    %77 = vrot.lane.b32.xlu0 %v45, 126
    %v78 = vpop.permute.xlu0 %77
    %v79 = vsel %vm53, %v78, 0
    %81 = vmatpush.msra.mxu0 0.0
    %82 = vmatpush.msra.mxu0 0.0
    %83 = vmatpush.msra.mxu0 0.0
    %84 = vmatpush.msra.mxu0 0.0
    %85 = vmatpush.msra.mxu0 0.0
    %86 = vmatpush.msra.mxu0 0.0
    %87 = vmatpush.msra.mxu0 0.0
    %88 = vmatpush.msra.mxu0 0.0
    %89 = vmatpush.msra.mxu0 0.0
    %90 = vmatpush.msra.mxu0 0.0
    %91 = vmatpush.msra.mxu0 0.0
    %92 = vmatpush.msra.mxu0 0.0
    %93 = vmatpush.msra.mxu0 0.0
    %94 = vmatpush.msra.mxu0 0.0
    %95 = vmatpush.msra.mxu0 0.0
    %96 = vmatpush.msra.mxu0 %v79
    %97 = vmatmul.f32.gmra.mxu0 %v51
    %v98 = vpop.f32.mrf.mxu0
    %v99 = vadd.f32 0.0, %v98
    %100 = vdwg.mxu0
    %v102 = vsel %vm49, %v41, 0
    %v104 = vsel %vm53, %v44, 0
    %106 = vmatpush.msra.mxu0 0.0
    %107 = vmatpush.msra.mxu0 0.0
    %108 = vmatpush.msra.mxu0 0.0
    %109 = vmatpush.msra.mxu0 0.0
    %110 = vmatpush.msra.mxu0 0.0
    %111 = vmatpush.msra.mxu0 0.0
    %112 = vmatpush.msra.mxu0 0.0
    %113 = vmatpush.msra.mxu0 0.0
    %114 = vmatpush.msra.mxu0 0.0
    %115 = vmatpush.msra.mxu0 0.0
    %116 = vmatpush.msra.mxu0 0.0
    %117 = vmatpush.msra.mxu0 0.0
    %118 = vmatpush.msra.mxu0 0.0
    %119 = vmatpush.msra.mxu0 0.0
    %120 = vmatpush.msra.mxu0 0.0
    %121 = vmatpush.msra.mxu0 %v104
    %122 = vmatmul.f32.gmra.mxu0 %v102
    %v123 = vpop.f32.mrf.mxu0
    %v124 = vadd.f32 %v74, %v123
    %125 = vdwg.mxu0
    %v126 = vsel %vm53, %v45, 0
    %128 = vmatpush.msra.mxu0 0.0
    %129 = vmatpush.msra.mxu0 0.0
    %130 = vmatpush.msra.mxu0 0.0
    %131 = vmatpush.msra.mxu0 0.0
    %132 = vmatpush.msra.mxu0 0.0
    %133 = vmatpush.msra.mxu0 0.0
    %134 = vmatpush.msra.mxu0 0.0
    %135 = vmatpush.msra.mxu0 0.0
    %136 = vmatpush.msra.mxu0 0.0
    %137 = vmatpush.msra.mxu0 0.0
    %138 = vmatpush.msra.mxu0 0.0
    %139 = vmatpush.msra.mxu0 0.0
    %140 = vmatpush.msra.mxu0 0.0
    %141 = vmatpush.msra.mxu0 0.0
    %142 = vmatpush.msra.mxu0 0.0
    %143 = vmatpush.msra.mxu0 %v126
    %144 = vmatmul.f32.gmra.mxu0 %v102
    %v145 = vpop.f32.mrf.mxu0
    %v146 = vadd.f32 %v99, %v145
    %147 = vdwg.mxu0
    %148 = vrot.lane.b32.xlu0 %v44, 124
    %v149 = vpop.permute.xlu0 %148
    %v151 = vsel %vm49, %v43, 0
    %v153 = vsel %vm53, %v149, 0
    %155 = vmatpush.msra.mxu0 0.0
    %156 = vmatpush.msra.mxu0 0.0
    %157 = vmatpush.msra.mxu0 0.0
    %158 = vmatpush.msra.mxu0 0.0
    %159 = vmatpush.msra.mxu0 0.0
    %160 = vmatpush.msra.mxu0 0.0
    %161 = vmatpush.msra.mxu0 0.0
    %162 = vmatpush.msra.mxu0 0.0
    %163 = vmatpush.msra.mxu0 0.0
    %164 = vmatpush.msra.mxu0 0.0
    %165 = vmatpush.msra.mxu0 0.0
    %166 = vmatpush.msra.mxu0 0.0
    %167 = vmatpush.msra.mxu0 0.0
    %168 = vmatpush.msra.mxu0 0.0
    %169 = vmatpush.msra.mxu0 0.0
    %170 = vmatpush.msra.mxu0 %v153
    %171 = vmatmul.f32.gmra.mxu0 %v151
    %v172 = vpop.f32.mrf.mxu0
    %v173 = vadd.f32 0.0, %v172
    %174 = vdwg.mxu0
    %175 = vrot.lane.b32.xlu0 %v45, 124
    %v176 = vpop.permute.xlu0 %175
    %v177 = vsel %vm53, %v176, 0
    %179 = vmatpush.msra.mxu0 0.0
    %180 = vmatpush.msra.mxu0 0.0
    %181 = vmatpush.msra.mxu0 0.0
    %182 = vmatpush.msra.mxu0 0.0
    %183 = vmatpush.msra.mxu0 0.0
    %184 = vmatpush.msra.mxu0 0.0
    %185 = vmatpush.msra.mxu0 0.0
    %186 = vmatpush.msra.mxu0 0.0
    %187 = vmatpush.msra.mxu0 0.0
    %188 = vmatpush.msra.mxu0 0.0
    %189 = vmatpush.msra.mxu0 0.0
    %190 = vmatpush.msra.mxu0 0.0
    %191 = vmatpush.msra.mxu0 0.0
    %192 = vmatpush.msra.mxu0 0.0
    %193 = vmatpush.msra.mxu0 0.0
    %194 = vmatpush.msra.mxu0 %v177
    %195 = vmatmul.f32.gmra.mxu0 %v151
    %v196 = vpop.f32.mrf.mxu0
    %v197 = vadd.f32 0.0, %v196
    %198 = vdwg.mxu0
    %v199 = vadd.f32 %v124, %v173
    %v200 = vadd.f32 %v146, %v197
    %v201 = vld [vmem:[#allocation3] sm:$0xff]
    %vm202 = vcmask 130048
    %v203 = vsel %vm202, %v199, 0.0
    %v204 = vsel %vm202, %v200, 0.0
    %v205 = vadd.f32 %v203, %v204
    %v206 = vadd.f32 %v201, %v205
    %207 = vst.msk [vmem:[#allocation3] sm:$0xff] %vm202, %v206
    %v208 = vld [vmem:[#allocation5] sm:$0xff]
    %v209 = vmul.f32 %v199, %v199
    %v210 = vmul.f32 %v200, %v200
    %v211 = vsel %vm202, %v209, 0.0
    %v212 = vsel %vm202, %v210, 0.0
    %v213 = vadd.f32 %v211, %v212
    %v214 = vadd.f32 %v208, %v213
    %215 = vst.msk [vmem:[#allocation5] sm:$0xff] %vm202, %v214
    // Predicated region
    $region14: #{tpu_custom_call.1} parent=1 // pred_check
      _
    $region15: #{tpu_custom_call.1} parent=1 // pred_check_branch
      %217 = sbr.rel (0) target = $region17
    $region16: #{tpu_custom_call.1} parent=1 // pred_region
      %219 = vsyncadd [#allocation4], 0
      %s221 = sshll.u32 [#allocation3], 4
      %s222 = int_to_ptr.vmem [resolvable:$true] %s221
      %s223 = sshll.u32 %s2, 4
      %s224 = int_to_ptr.hbm [resolvable:$true] %s223
      %226 = dma.vmem_to_hbm [thread:$0]  %s222, 128, %s224, [#allocation4]
    $region17: #{tpu_custom_call.1} parent=1 // pred_fallthru
      _
    // Predicated region
    $region18: #{tpu_custom_call.1} parent=1 // pred_check
      _
    $region19: #{tpu_custom_call.1} parent=1 // pred_check_branch
      %228 = sbr.rel (0) target = $region21
    $region20: #{tpu_custom_call.1} parent=1 // pred_region
      %230 = vsyncadd [#allocation6], 0
      %s232 = sshll.u32 [#allocation5], 4
      %s233 = int_to_ptr.vmem [resolvable:$true] %s232
      %s234 = sshll.u32 %s3, 4
      %s235 = int_to_ptr.hbm [resolvable:$true] %s234
      %237 = dma.vmem_to_hbm [thread:$0]  %s233, 128, %s235, [#allocation6]
    $region21: #{tpu_custom_call.1} parent=1 // pred_fallthru
      _
    // Predicated region
    $region22: #{tpu_custom_call.1} parent=1 // pred_check
      _
    $region23: #{tpu_custom_call.1} parent=1 // pred_check_branch
      %239 = sbr.rel (0) target = $region25
    $region24: #{tpu_custom_call.1} parent=1 // pred_region
      %241 = dma.done [#allocation4], 128
    $region25: #{tpu_custom_call.1} parent=1 // pred_fallthru
      _
    // Predicated region
    $region26: #{tpu_custom_call.1} parent=1 // pred_check
      _
    $region27: #{tpu_custom_call.1} parent=1 // pred_check_branch
      %243 = sbr.rel (0) target = $region29
    $region28: #{tpu_custom_call.1} parent=1 // pred_region
      %245 = dma.done [#allocation6], 128
    $region29: #{tpu_custom_call.1} parent=1 // pred_fallthru
      _
    %246 = vsyncpa [#allocation4], 1
    %247 = vsyncpa [#allocation6], 1

</llo_original>
